<compile_context>
chip_gen: v7x
topology: tpu7x:2x2x1
jax: 0.10.0
libtpu: 0.0.40
codegen_flags: <defaults>
</compile_context>

<pallas_src>
import math

import jax
import jax.numpy as jnp
from jax.experimental import pallas as pl
from jax.experimental.pallas import tpu as pltpu


def _round_up(v, m):
    return (v + m - 1) // m * m


def _linear_lora_kernel(x_ref, w_ref, b_ref, xa_ref, lb_ref, o_ref):
    """One (TM, TN) output tile of  y = x @ W + bias + (alpha * x@A) @ B.

    x_ref  : (TM, TK) bf16  activation tile
    w_ref  : (TK, TN) bf16  base weight tile (stored as (in, out))
    b_ref  : (1,  TN) f32   bias tile
    xa_ref : (TM, R)  bf16  pre-computed alpha * (x @ A) tile (rank kept whole)
    lb_ref : (R,  TN) bf16  LoRA B tile (N-sliced, rank kept whole)
    o_ref  : (TM, TN) f32   output tile, used directly as the K accumulator
    """
    k = pl.program_id(2)

    @pl.when(k == 0)
    def _init():
        o_ref[...] = jnp.zeros_like(o_ref)

    o_ref[...] += jnp.dot(x_ref[...], w_ref[...],
                          preferred_element_type=jnp.float32)

    @pl.when(k == pl.num_programs(2) - 1)
    def _finalize():
        lora = jnp.dot(xa_ref[...], lb_ref[...],
                       preferred_element_type=jnp.float32)
        o_ref[...] += b_ref[...] + lora


def prepare_params(w, bias, lora_a, lora_b, *, tn=512, tk=512):
    """One-time weight preparation (transpose / bf16 cast / lane padding).

    Do this at parameter-load time, NOT per forward call: the transpose + cast
    + pad of the base weight is a full HBM read/write of the largest tensor
    and would otherwise roughly double the per-call HBM traffic.

    w      : (out_dim, in_dim) f32   (PyTorch nn.Linear layout)
    bias   : (out_dim,)        f32
    lora_a : (in_dim, rank)    f32
    lora_b : (rank, out_dim)   f32
    """
    out_dim, in_dim = w.shape
    rank = lora_a.shape[1]

    tk_eff = min(tk, _round_up(in_dim, 128))
    tn_eff = min(tn, _round_up(out_dim, 128))
    kp = _round_up(in_dim, tk_eff)
    np_ = _round_up(out_dim, tn_eff)
    rp = _round_up(max(rank, 1), 128)   # rank padded to one full lane vreg

    w_t = jnp.pad(w.T.astype(jnp.bfloat16),
                  ((0, kp - in_dim), (0, np_ - out_dim)))
    bias2d = jnp.pad(bias.astype(jnp.float32).reshape(1, out_dim),
                     ((0, 0), (0, np_ - out_dim)))
    a_p = jnp.pad(lora_a.astype(jnp.bfloat16),
                  ((0, kp - in_dim), (0, rp - rank)))
    b_p = jnp.pad(lora_b.astype(jnp.bfloat16),
                  ((0, rp - rank), (0, np_ - out_dim)))

    return dict(w_t=w_t, bias2d=bias2d, a_p=a_p, b_p=b_p,
                in_dim=in_dim, out_dim=out_dim, rank=rank,
                tk=tk_eff, tn=tn_eff, kp=kp, np_=np_, rp=rp)


def linear_with_lora(x, params, alpha, *, tm=512):
    """y = x @ W^T + bias + alpha * ((x @ A) @ B)

    x      : (batch, seq, in_dim) f32
    params : output of prepare_params()
    """
    batch, seq, in_dim = x.shape
    assert in_dim == params["in_dim"]
    out_dim = params["out_dim"]
    kp, np_, rp = params["kp"], params["np_"], params["rp"]
    tk, tn = params["tk"], params["tn"]

    m = batch * seq
    tm_eff = min(tm, _round_up(m, 8))
    mp = _round_up(m, tm_eff)

    x2d = jnp.pad(x.reshape(m, in_dim).astype(jnp.bfloat16),
                  ((0, mp - m), (0, kp - in_dim)))

    # LoRA pre-pass: xa = alpha * (x @ A).  Depends only on (M, K), so it is
    # computed exactly once here (tiny (mp, rp) memory-bound matmul) instead of
    # being re-computed inside the grid for every N tile.
    xa = (alpha * jnp.dot(x2d, params["a_p"],
                          preferred_element_type=jnp.float32)
          ).astype(jnp.bfloat16)

    grid = (mp // tm_eff, np_ // tn, kp // tk)

    flops = 2 * mp * np_ * kp + 2 * mp * rp * np_
    bytes_accessed = (x2d.size * 2 + params["w_t"].size * 2
                      + params["bias2d"].size * 4 + xa.size * 2
                      + params["b_p"].size * 2 + mp * np_ * 4)

    # Double-buffered per-tile VMEM footprint + headroom, capped at 48 MiB so
    # the same config fits a v7x TensorCore (64 MiB physical VMEM per TC).
    tile_bytes = 2 * (tm_eff * tk * 2 + tk * tn * 2 + tn * 4
                      + tm_eff * rp * 2 + rp * tn * 2 + tm_eff * tn * 4)
    vmem_limit = min(48 * 1024 * 1024,
                     max(32 * 1024 * 1024, tile_bytes + (4 << 20)))

    out2d = pl.pallas_call(
        _linear_lora_kernel,
        out_shape=jax.ShapeDtypeStruct((mp, np_), jnp.float32),
        grid_spec=pltpu.PrefetchScalarGridSpec(
            num_scalar_prefetch=0,
            grid=grid,
            in_specs=[
                pl.BlockSpec((tm_eff, tk), lambda i, j, k: (i, k)),   # x
                pl.BlockSpec((tk, tn), lambda i, j, k: (k, j)),       # W (in,out)
                pl.BlockSpec((1, tn), lambda i, j, k: (0, j)),        # bias
                pl.BlockSpec((tm_eff, rp), lambda i, j, k: (i, 0)),   # alpha*(x@A)
                pl.BlockSpec((rp, tn), lambda i, j, k: (0, j)),       # LoRA B
            ],
            out_specs=pl.BlockSpec((tm_eff, tn), lambda i, j, k: (i, j)),
        ),
        compiler_params=pltpu.CompilerParams(
            dimension_semantics=("parallel", "parallel", "arbitrary"),
            vmem_limit_bytes=int(vmem_limit),
        ),
        cost_estimate=pl.CostEstimate(flops=int(flops), transcendentals=0,
                                      bytes_accessed=int(bytes_accessed)),
    )(x2d, params["w_t"], params["bias2d"], xa, params["b_p"])

    return out2d[:m, :out_dim].reshape(batch, seq, out_dim)


def _reference(x, w, bias, lora_a, lora_b, alpha):
    """Pure-JAX f32 reference (HIGHEST precision matmuls)."""
    b_, s_, k_ = x.shape
    x2d = x.reshape(b_ * s_, k_)
    hp = jax.lax.Precision.HIGHEST
    base = jnp.dot(x2d, w.T, precision=hp) + bias
    lora = alpha * jnp.dot(jnp.dot(x2d, lora_a, precision=hp), lora_b,
                           precision=hp)
    return (base + lora).reshape(b_, s_, -1)


if __name__ == "__main__":
    def run_case(batch, seq, in_dim, out_dim, rank, alpha, seed,
                 tm=512, tn=512, tk=512):
        key = jax.random.PRNGKey(seed)
        kx, kw, kb, ka, kbm = jax.random.split(key, 5)

        x = jax.random.normal(kx, (batch, seq, in_dim), dtype=jnp.float32)

        # Base nn.Linear params (kaiming-uniform-style bounds), PyTorch layout.
        bound_w = 1.0 / math.sqrt(in_dim)
        w = jax.random.uniform(kw, (out_dim, in_dim), jnp.float32,
                               -bound_w, bound_w)
        bias = jax.random.uniform(kb, (out_dim,), jnp.float32,
                                  -bound_w, bound_w)

        # LoRA A: kaiming_uniform_(a=sqrt(5)) over shape (in_dim, rank).
        gain = math.sqrt(2.0 / (1.0 + 5.0))
        bound_a = gain * math.sqrt(3.0 / in_dim)
        lora_a = jax.random.uniform(ka, (in_dim, rank), jnp.float32,
                                    -bound_a, bound_a)
        # Module inits B to zeros; use small random values so the LoRA path is
        # actually exercised numerically (set to zeros to match checkpoint init).
        lora_b = 0.02 * jax.random.normal(kbm, (rank, out_dim),
                                          dtype=jnp.float32)

        params = prepare_params(w, bias, lora_a, lora_b, tn=tn, tk=tk)
        out = jax.block_until_ready(linear_with_lora(x, params, alpha, tm=tm))
        ref = _reference(x, w, bias, lora_a, lora_b, alpha)

        assert out.shape == (batch, seq, out_dim)
        err = float(jnp.max(jnp.abs(out - ref)))
        scale = float(jnp.max(jnp.abs(ref))) + 1e-6
        assert err / scale < 2e-2, (
            f"mismatch vs reference: rel err {err / scale:.4e}")

    # Multi-tile grid (2, 2, 2): exercises K-accumulation into the resident
    # output tile, the k==last finalize, and megacore-shardable i/j axes.
    run_case(batch=2, seq=64, in_dim=512, out_dim=512, rank=8, alpha=16.0,
             seed=0, tm=64, tn=256, tk=256)
    # Same shapes with the large default tiles (single-tile grid).
    run_case(batch=2, seq=64, in_dim=512, out_dim=512, rank=8, alpha=16.0,
             seed=1)
    # Tiny, ragged case (shapes not tile multiples): exercises tile clamping
    # and the padding path.
    run_case(batch=2, seq=8, in_dim=32, out_dim=64, rank=4, alpha=16.0, seed=0)

    print("KERNEL_OK")
</pallas_src>

<mosaic_0001>
module attributes {stable_mosaic.version = 11 : i64} {
  func.func @_linear_lora_kernel(%arg0: i32, %arg1: i32, %arg2: i32, %arg3: memref<64x256xbf16, #tpu.memory_space<vmem>>, %arg4: memref<256x256xbf16, #tpu.memory_space<vmem>>, %arg5: memref<1x256xf32, #tpu.memory_space<vmem>>, %arg6: memref<64x128xbf16, #tpu.memory_space<vmem>>, %arg7: memref<128x256xbf16, #tpu.memory_space<vmem>>, %arg8: memref<64x256xf32, #tpu.memory_space<vmem>>) attributes {dimension_semantics = [#tpu.dimension_semantics<parallel>, #tpu.dimension_semantics<parallel>, #tpu.dimension_semantics<arbitrary>], iteration_bounds = array<i64: 2, 2, 2>, scalar_prefetch = 0 : i64, scratch_operands = 0 : i64, tpu.core_type = #tpu.core_type<tc>, window_params = [{transform_indices = @transform_0, window_bounds = array<i64: 64, 256>}, {transform_indices = @transform_1, window_bounds = array<i64: 256, 256>}, {transform_indices = @transform_2, window_bounds = array<i64: 1, 256>}, {transform_indices = @transform_3, window_bounds = array<i64: 64, 128>}, {transform_indices = @transform_4, window_bounds = array<i64: 128, 256>}, {transform_indices = @transform_5, window_bounds = array<i64: 64, 256>}]} {
    %c0_i32 = arith.constant 0 : i32
    %0 = arith.cmpi eq, %arg2, %c0_i32 : i32
    %1 = arith.extui %0 : i1 to i32
    %c0_i32_0 = arith.constant 0 : i32
    %2 = arith.cmpi ne, %1, %c0_i32_0 : i32
    scf.if %2 {
      %cst_9 = arith.constant 0.000000e+00 : f32
      %12 = vector.broadcast %cst_9 : f32 to vector<64x256xf32>
      %c0_10 = arith.constant 0 : index
      %c0_11 = arith.constant 0 : index
      %13 = vector.load %arg8[%c0_10, %c0_11] : memref<64x256xf32, #tpu.memory_space<vmem>>, vector<64x256xf32>
      tpu.vector_store %arg8[%c0_10, %c0_11], %12 {strides = array<i32>} : memref<64x256xf32, #tpu.memory_space<vmem>>, vector<64x256xf32>,
    } else {
    }
    %c0 = arith.constant 0 : index
    %c0_1 = arith.constant 0 : index
    %3 = vector.load %arg8[%c0, %c0_1] : memref<64x256xf32, #tpu.memory_space<vmem>>, vector<64x256xf32>
    %c0_2 = arith.constant 0 : index
    %c0_3 = arith.constant 0 : index
    %4 = vector.load %arg3[%c0_2, %c0_3] : memref<64x256xbf16, #tpu.memory_space<vmem>>, vector<64x256xbf16>
    %c0_4 = arith.constant 0 : index
    %c0_5 = arith.constant 0 : index
    %5 = vector.load %arg4[%c0_4, %c0_5] : memref<256x256xbf16, #tpu.memory_space<vmem>>, vector<256x256xbf16>
    %cst = arith.constant dense<0.000000e+00> : vector<64x256xf32>
    %6 = tpu.matmul %4, %5, %cst {dimension_numbers = #tpu.dot_dimension_numbers<[1], [0], [0], [1], [0, 0, 1, 1], [], []>} : vector<64x256xbf16>, vector<256x256xbf16>, vector<64x256xf32> -> vector<64x256xf32>
    %7 = arith.addf %3, %6 : vector<64x256xf32>
    %c0_6 = arith.constant 0 : index
    %c0_7 = arith.constant 0 : index
    %8 = vector.load %arg8[%c0_6, %c0_7] : memref<64x256xf32, #tpu.memory_space<vmem>>, vector<64x256xf32>
    tpu.vector_store %arg8[%c0_6, %c0_7], %7 {strides = array<i32>} : memref<64x256xf32, #tpu.memory_space<vmem>>, vector<64x256xf32>,
    %c1_i32 = arith.constant 1 : i32
    %9 = arith.cmpi eq, %arg2, %c1_i32 : i32
    %10 = arith.extui %9 : i1 to i32
    %c0_i32_8 = arith.constant 0 : i32
    %11 = arith.cmpi ne, %10, %c0_i32_8 : i32
    scf.if %11 {
      %c0_9 = arith.constant 0 : index
      %c0_10 = arith.constant 0 : index
      %12 = vector.load %arg6[%c0_9, %c0_10] : memref<64x128xbf16, #tpu.memory_space<vmem>>, vector<64x128xbf16>
      %c0_11 = arith.constant 0 : index
      %c0_12 = arith.constant 0 : index
      %13 = vector.load %arg7[%c0_11, %c0_12] : memref<128x256xbf16, #tpu.memory_space<vmem>>, vector<128x256xbf16>
      %cst_13 = arith.constant dense<0.000000e+00> : vector<64x256xf32>
      %14 = tpu.matmul %12, %13, %cst_13 {dimension_numbers = #tpu.dot_dimension_numbers<[1], [0], [0], [1], [0, 0, 1, 1], [], []>} : vector<64x128xbf16>, vector<128x256xbf16>, vector<64x256xf32> -> vector<64x256xf32>
      %c0_14 = arith.constant 0 : index
      %c0_15 = arith.constant 0 : index
      %15 = vector.load %arg8[%c0_14, %c0_15] : memref<64x256xf32, #tpu.memory_space<vmem>>, vector<64x256xf32>
      %c0_16 = arith.constant 0 : index
      %c0_17 = arith.constant 0 : index
      %16 = vector.load %arg5[%c0_16, %c0_17] : memref<1x256xf32, #tpu.memory_space<vmem>>, vector<1x256xf32>
      %17 = vector.broadcast %16 : vector<1x256xf32> to vector<64x256xf32>
      %18 = arith.addf %17, %14 : vector<64x256xf32>
      %19 = arith.addf %15, %18 : vector<64x256xf32>
      %c0_18 = arith.constant 0 : index
      %c0_19 = arith.constant 0 : index
      %20 = vector.load %arg8[%c0_18, %c0_19] : memref<64x256xf32, #tpu.memory_space<vmem>>, vector<64x256xf32>
      tpu.vector_store %arg8[%c0_18, %c0_19], %19 {strides = array<i32>} : memref<64x256xf32, #tpu.memory_space<vmem>>, vector<64x256xf32>,
    } else {
    }
    return
  }
  func.func @transform_0(%arg0: i32, %arg1: i32, %arg2: i32) -> (i32, i32) {
    %c0_i32 = arith.constant 0 : i32
    return %arg0, %arg2 : i32, i32
  }
  func.func @transform_1(%arg0: i32, %arg1: i32, %arg2: i32) -> (i32, i32) {
    %c0_i32 = arith.constant 0 : i32
    return %arg2, %arg1 : i32, i32
  }
  func.func @transform_2(%arg0: i32, %arg1: i32, %arg2: i32) -> (i32, i32) {
    %c0_i32 = arith.constant 0 : i32
    %c0_i32_0 = arith.constant 0 : i32
    return %c0_i32, %arg1 : i32, i32
  }
  func.func @transform_3(%arg0: i32, %arg1: i32, %arg2: i32) -> (i32, i32) {
    %c0_i32 = arith.constant 0 : i32
    %c0_i32_0 = arith.constant 0 : i32
    return %arg0, %c0_i32 : i32, i32
  }
  func.func @transform_4(%arg0: i32, %arg1: i32, %arg2: i32) -> (i32, i32) {
    %c0_i32 = arith.constant 0 : i32
    %c0_i32_0 = arith.constant 0 : i32
    return %c0_i32, %arg1 : i32, i32
  }
  func.func @transform_5(%arg0: i32, %arg1: i32, %arg2: i32) -> (i32, i32) {
    %c0_i32 = arith.constant 0 : i32
    return %arg0, %arg1 : i32, i32
  }
}

</mosaic_0001>

<llo_original>
// kernel: tpu_custom_call.1
$region0: #{tpu_custom_call.1}
  #allocation0 [shape = 'u32[]', space=smem, size = 0x4, offset = 0x4, fixed_abs, tag = 'smem constant byte address 0x4 - core index']
  #allocation1 [shape = 'u32[144,128]{1,0:T(1,128)}', space=vmem, size = 0x12000, scoped, tag = 'internal scratch']
  %s0 = inlined_call_operand.hbm [shape: bf16[128,512], index: 0, kind: input, shape index: {}]
  %s1 = inlined_call_operand.hbm [shape: bf16[512,512], index: 1, kind: input, shape index: {}]
  %s2 = inlined_call_operand.vmem [shape: f32[1,512], index: 2, kind: input, shape index: {}]
  %s3 = inlined_call_operand.hbm [shape: bf16[128,128], index: 3, kind: input, shape index: {}]
  %s4 = inlined_call_operand.hbm [shape: bf16[128,512], index: 4, kind: input, shape index: {}]
  %s5 = inlined_call_operand.hbm [shape: f32[128,512], index: 5, kind: output, shape index: {}]
  %s6 = sld [smem:[#allocation0]]
  $region77: #{tpu_custom_call.1} parent=0
    _
  %s8 = ssub.s32 1, %s6
  %s9 = scalar_select 0, %s8, %s6
  $region1: #{tpu_custom_call.1} parent=0
    #allocation2 [shape = 'u8[65536]{0}', space=vmem, size = 0x10000, scoped, tag = 'input window, operand 0']
    #allocation3 [shape = 's32[2]{0}', space=sflag, size = 0x8, scoped, tag = 'scoped memory for tpu_custom_call.1']
    #allocation4 [shape = 's32[2]{0}', space=sflag, size = 0x8, scoped, tag = 'scoped memory for tpu_custom_call.1']
    #allocation5 [shape = 'u8[262144]{0}', space=vmem, size = 0x40000, scoped, tag = 'input window, operand 1']
    #allocation6 [shape = 's32[2]{0}', space=sflag, size = 0x8, scoped, tag = 'scoped memory for tpu_custom_call.1']
    #allocation7 [shape = 'u8[32768]{0}', space=vmem, size = 0x8000, scoped, tag = 'input window, operand 3']
    #allocation8 [shape = 'u8[131072]{0}', space=vmem, size = 0x20000, scoped, tag = 'input window, operand 4']
    #allocation9 [shape = 's32[2]{0}', space=sflag, size = 0x8, scoped, tag = 'scoped memory for tpu_custom_call.1']
    #allocation10 [shape = 'u8[131072]{0}', space=vmem, size = 0x20000, scoped, tag = 'output window, operand 0']
    %10 = vsyncpa [#allocation3], 0
    %s11 = scalar_lea.sflag [#allocation3], 1
    %12 = vsyncpa %s11, 0
    %13 = vsyncpa [#allocation6], 0
    %s14 = scalar_lea.sflag [#allocation6], 1
    %15 = vsyncpa %s14, 0
    %16 = vsyncpa [#allocation9], 0
    %s17 = scalar_lea.sflag [#allocation9], 1
    %18 = vsyncpa %s17, 0
    %19 = vsyncpa [#allocation4], 0
    %s20 = scalar_lea.sflag [#allocation4], 1
    %21 = vsyncpa %s20, 0
    loop: start=0, step=1, limit=10
    $region2: #{tpu_custom_call.1} parent=1 // loop_pre_header
      _
    $region3: #{tpu_custom_call.1} parent=1 // loop_header
      %s23 = sphi 0, %s27
      %p24 = scmp.ge.s32.totalorder %s23, 10
      %s30 = sphi 0, %s49
      %s31 = sphi 0, %s45
      %s32 = sphi 0, %s41
      %s33 = sphi 0, %s30
      %s34 = sphi 0, %s31
      %s35 = sphi 0, %s32
      %s36 = sphi 0, %s33
      %s37 = sphi 0, %s34
      %s38 = sphi 0, %s35
      %s54 = sphi 0, %s56
      %s57 = sphi 0, %s54
      %s58 = sphi 0, %s57
      %s74 = sphi 0, %s58
      %s82 = sphi 0, %s84
      %s85 = sphi 0, %s82
      %s86 = sphi 0, %s85
      %s102 = sphi 0, %s86
      %s108 = sphi 0, %s110
      %s111 = sphi 0, %s108
      %s112 = sphi 0, %s111
      %s128 = sphi 0, %s112
      %s134 = sphi 0, %s136
      %s137 = sphi 0, %s134
      %s138 = sphi 0, %s137
      %s154 = sphi 0, %s138
      %s160 = sphi 0, %s162
      %s163 = sphi 0, %s160
      %s164 = sphi 0, %s163
      %s180 = sphi 0, %s164
      %s188 = sphi 0, %s190
      %s191 = sphi 0, %s188
      %s192 = sphi 0, %s191
      %s208 = sphi 0, %s192
    $region4: #{tpu_custom_call.1} parent=1 // loop_header_branch
      %26 = sbr.rel (%p24) target = $region8
    $region5: #{tpu_custom_call.1} parent=1 // loop_body
      %s28 = ssub.s32 %s23, 1
      %s29 = ssub.s32 %s23, 2
      %s39 = sadd.s32 1, %s32
      %p40 = scmp.ge.s32.totalorder %s39, 2
      %s41 = scalar_select %p40, 0, %s39
      %s42 = sadd.s32 1, %s31
      %s43 = scalar_select %p40, %s42, %s31
      %p44 = scmp.ge.s32.totalorder %s43, 2
      %s45 = scalar_select %p44, 0, %s43
      %s46 = sadd.s32 1, %s30
      %s47 = scalar_select %p44, %s46, %s30
      %p48 = scmp.ge.s32.totalorder %s47, 2
      %s49 = scalar_select %p48, 0, %s47
      %s50 = ssub.s32 %s30, %s49
      %s51 = ssub.s32 %s32, %s41
      %s52 = sor.u32 %s50, %s51
      %p53 = scmp.eq.s32.totalorder %s52, 0
      %s55 = sadd.s32 %s54, 1
      %s56 = scalar_select %p53, %s54, %s55
      %p59 = pneg %p53
      %p60 = scmp.eq.s32.totalorder %s23, 7
      %p61 = por %p59, %p60
      %p62 = scmp.ne.s32.totalorder %s54, %s57
      %p63 = scmp.eq.s32.totalorder %s23, 0
      %p64 = por %p62, %p63
      %p65 = scmp.ne.s32.totalorder %s54, %s57
      %p66 = scmp.eq.s32.totalorder %s28, 7
      %p67 = por %p65, %p66
      %p68 = scmp.ne.s32.totalorder %s57, %s58
      %p69 = scmp.eq.s32.totalorder %s28, 0
      %p70 = por %p68, %p69
      %p71 = scmp.ne.s32.totalorder %s57, %s58
      %p72 = scmp.eq.s32.totalorder %s29, 7
      %p73 = por %p71, %p72
      %p75 = scmp.ne.s32.totalorder %s58, %s74
      %p76 = scmp.eq.s32.totalorder %s29, 0
      %p77 = por %p75, %p76
      %s78 = ssub.s32 %s32, %s41
      %s79 = ssub.s32 %s31, %s45
      %s80 = sor.u32 %s78, %s79
      %p81 = scmp.eq.s32.totalorder %s80, 0
      %s83 = sadd.s32 %s82, 1
      %s84 = scalar_select %p81, %s82, %s83
      %p87 = pneg %p81
      %p88 = scmp.eq.s32.totalorder %s23, 7
      %p89 = por %p87, %p88
      %p90 = scmp.ne.s32.totalorder %s82, %s85
      %p91 = scmp.eq.s32.totalorder %s23, 0
      %p92 = por %p90, %p91
      %p93 = scmp.ne.s32.totalorder %s82, %s85
      %p94 = scmp.eq.s32.totalorder %s28, 7
      %p95 = por %p93, %p94
      %p96 = scmp.ne.s32.totalorder %s85, %s86
      %p97 = scmp.eq.s32.totalorder %s28, 0
      %p98 = por %p96, %p97
      %p99 = scmp.ne.s32.totalorder %s85, %s86
      %p100 = scmp.eq.s32.totalorder %s29, 7
      %p101 = por %p99, %p100
      %p103 = scmp.ne.s32.totalorder %s86, %s102
      %p104 = scmp.eq.s32.totalorder %s29, 0
      %p105 = por %p103, %p104
      %s106 = ssub.s32 %s31, %s45
      %p107 = scmp.eq.s32.totalorder %s106, 0
      %s109 = sadd.s32 %s108, 1
      %s110 = scalar_select %p107, %s108, %s109
      %p113 = pneg %p107
      %p114 = scmp.eq.s32.totalorder %s23, 7
      %p115 = por %p113, %p114
      %p116 = scmp.ne.s32.totalorder %s108, %s111
      %p117 = scmp.eq.s32.totalorder %s23, 0
      %p118 = por %p116, %p117
      %p119 = scmp.ne.s32.totalorder %s108, %s111
      %p120 = scmp.eq.s32.totalorder %s28, 7
      %p121 = por %p119, %p120
      %p122 = scmp.ne.s32.totalorder %s111, %s112
      %p123 = scmp.eq.s32.totalorder %s28, 0
      %p124 = por %p122, %p123
      %p125 = scmp.ne.s32.totalorder %s111, %s112
      %p126 = scmp.eq.s32.totalorder %s29, 7
      %p127 = por %p125, %p126
      %p129 = scmp.ne.s32.totalorder %s112, %s128
      %p130 = scmp.eq.s32.totalorder %s29, 0
      %p131 = por %p129, %p130
      %s132 = ssub.s32 %s30, %s49
      %p133 = scmp.eq.s32.totalorder %s132, 0
      %s135 = sadd.s32 %s134, 1
      %s136 = scalar_select %p133, %s134, %s135
      %p139 = pneg %p133
      %p140 = scmp.eq.s32.totalorder %s23, 7
      %p141 = por %p139, %p140
      %p142 = scmp.ne.s32.totalorder %s134, %s137
      %p143 = scmp.eq.s32.totalorder %s23, 0
      %p144 = por %p142, %p143
      %p145 = scmp.ne.s32.totalorder %s134, %s137
      %p146 = scmp.eq.s32.totalorder %s28, 7
      %p147 = por %p145, %p146
      %p148 = scmp.ne.s32.totalorder %s137, %s138
      %p149 = scmp.eq.s32.totalorder %s28, 0
      %p150 = por %p148, %p149
      %p151 = scmp.ne.s32.totalorder %s137, %s138
      %p152 = scmp.eq.s32.totalorder %s29, 7
      %p153 = por %p151, %p152
      %p155 = scmp.ne.s32.totalorder %s138, %s154
      %p156 = scmp.eq.s32.totalorder %s29, 0
      %p157 = por %p155, %p156
      %s158 = ssub.s32 %s31, %s45
      %p159 = scmp.eq.s32.totalorder %s158, 0
      %s161 = sadd.s32 %s160, 1
      %s162 = scalar_select %p159, %s160, %s161
      %p165 = pneg %p159
      %p166 = scmp.eq.s32.totalorder %s23, 7
      %p167 = por %p165, %p166
      %p168 = scmp.ne.s32.totalorder %s160, %s163
      %p169 = scmp.eq.s32.totalorder %s23, 0
      %p170 = por %p168, %p169
      %p171 = scmp.ne.s32.totalorder %s160, %s163
      %p172 = scmp.eq.s32.totalorder %s28, 7
      %p173 = por %p171, %p172
      %p174 = scmp.ne.s32.totalorder %s163, %s164
      %p175 = scmp.eq.s32.totalorder %s28, 0
      %p176 = por %p174, %p175
      %p177 = scmp.ne.s32.totalorder %s163, %s164
      %p178 = scmp.eq.s32.totalorder %s29, 7
      %p179 = por %p177, %p178
      %p181 = scmp.ne.s32.totalorder %s164, %s180
      %p182 = scmp.eq.s32.totalorder %s29, 0
      %p183 = por %p181, %p182
      %s184 = ssub.s32 %s30, %s49
      %s185 = ssub.s32 %s31, %s45
      %s186 = sor.u32 %s184, %s185
      %p187 = scmp.eq.s32.totalorder %s186, 0
      %s189 = sadd.s32 %s188, 1
      %s190 = scalar_select %p187, %s188, %s189
      %p193 = pneg %p187
      %p194 = scmp.eq.s32.totalorder %s23, 7
      %p195 = por %p193, %p194
      %p196 = scmp.ne.s32.totalorder %s188, %s191
      %p197 = scmp.eq.s32.totalorder %s23, 0
      %p198 = por %p196, %p197
      %p199 = scmp.ne.s32.totalorder %s188, %s191
      %p200 = scmp.eq.s32.totalorder %s28, 7
      %p201 = por %p199, %p200
      %p202 = scmp.ne.s32.totalorder %s191, %s192
      %p203 = scmp.eq.s32.totalorder %s28, 0
      %p204 = por %p202, %p203
      %p205 = scmp.ne.s32.totalorder %s191, %s192
      %p206 = scmp.eq.s32.totalorder %s29, 7
      %p207 = por %p205, %p206
      %p209 = scmp.ne.s32.totalorder %s192, %s208
      %p210 = scmp.eq.s32.totalorder %s29, 0
      %p211 = por %p209, %p210
      %p212 = scmp.le.s32.totalorder 1, %s23
      %p213 = scmp.lt.s32.totalorder %s23, 9
      %p214 = pnand %p212, %p213
      %p215 = pneg %p214
      // Predicated region
      $region9: #{tpu_custom_call.1} parent=5 // pred_check
        _
      $region10: #{tpu_custom_call.1} parent=5 // pred_check_branch
        %217 = sbr.rel (%p214) target = $region12
      $region11: #{tpu_custom_call.1} parent=5 // pred_region
        %s218 = ssub.s32 %s23, 1
      $region12: #{tpu_custom_call.1} parent=5 // pred_fallthru
        _
      %p219 = scmp.lt.s32.totalorder %s23, 8
      // Predicated region
      $region13: #{tpu_custom_call.1} parent=5 // pred_check
        %p220 = pneg %p219
      $region14: #{tpu_custom_call.1} parent=5 // pred_check_branch
        %222 = sbr.rel (%p220) target = $region16
      $region15: #{tpu_custom_call.1} parent=5 // pred_region
        // Predicated region
        $region17: #{tpu_custom_call.1} parent=15 // pred_check
          %p223 = pneg %p64
        $region18: #{tpu_custom_call.1} parent=15 // pred_check_branch
          %225 = sbr.rel (%p223) target = $region20
        $region19: #{tpu_custom_call.1} parent=15 // pred_region
          %s226 = sand.u32 %s54, 1
          %s227 = scalar_lea.sflag [#allocation3], %s226
          %s228 = sand.u32 %s54, 1
          %s229 = smul.addr %s228, 64
          %s230 = scalar_lea.vmem [#allocation2], %s229
          %s231 = smul.u32 8, %s30
          %s232 = smul.u32 2, %s32
          %s234 = ssub.s32 1024, 1024
          %235 = vsyncadd %s227, %s234
          %s236 = smul.addr %s231, 4
          %s237 = sadd.s32 %s232, %s236
          %s238 = smul.addr %s237, 64
          %s239 = scalar_lea.hbm %s0, %s238
          %s240 = sshll.u32 %s230, 4
          %s241 = int_to_ptr.vmem [resolvable:$true] %s240
          %246 = dma.hbm_to_vmem [thread:$0]  %s239, 1024, %s241, %s227, 256, 128, 8
        $region20: #{tpu_custom_call.1} parent=15 // pred_fallthru
          _
        // Predicated region
        $region21: #{tpu_custom_call.1} parent=15 // pred_check
          %p247 = pneg %p92
        $region22: #{tpu_custom_call.1} parent=15 // pred_check_branch
          %249 = sbr.rel (%p247) target = $region24
        $region23: #{tpu_custom_call.1} parent=15 // pred_region
          %s250 = sand.u32 %s23, 1
          %s251 = scalar_lea.sflag [#allocation6], %s250
          %s252 = sand.u32 %s82, 1
          %s253 = smul.addr %s252, 256
          %s254 = scalar_lea.vmem [#allocation5], %s253
          %s255 = smul.u32 32, %s32
          %s256 = smul.u32 2, %s31
          %s258 = ssub.s32 4096, 4096
          %259 = vsyncadd %s251, %s258
          %s260 = smul.addr %s255, 4
          %s261 = sadd.s32 %s256, %s260
          %s262 = smul.addr %s261, 64
          %s263 = scalar_lea.hbm %s1, %s262
          %s264 = sshll.u32 %s254, 4
          %s265 = int_to_ptr.vmem [resolvable:$true] %s264
          %270 = dma.hbm_to_vmem [thread:$0]  %s263, 4096, %s265, %s251, 256, 128, 8
        $region24: #{tpu_custom_call.1} parent=15 // pred_fallthru
          _
        // Predicated region
        $region25: #{tpu_custom_call.1} parent=15 // pred_check
          %p271 = pneg %p118
        $region26: #{tpu_custom_call.1} parent=15 // pred_check_branch
          %273 = sbr.rel (%p271) target = $region28
        $region27: #{tpu_custom_call.1} parent=15 // pred_region
          %s274 = smul.u32 2, %s31
          %p275 = scmp.lt.s32.totalorder %s274, 3
          %s276 = scalar_select %p275, %s274, 3
          %s277 = scalar_lea.vmem %s2, %s276
          %s278 = smul.u32 2, %s31
        $region28: #{tpu_custom_call.1} parent=15 // pred_fallthru
          _
        // Predicated region
        $region29: #{tpu_custom_call.1} parent=15 // pred_check
          %p279 = pneg %p144
        $region30: #{tpu_custom_call.1} parent=15 // pred_check_branch
          %281 = sbr.rel (%p279) target = $region32
        $region31: #{tpu_custom_call.1} parent=15 // pred_region
          %s282 = sand.u32 %s23, 1
          %s283 = scalar_lea.sflag [#allocation6], %s282
          %s284 = sand.u32 %s134, 1
          %s285 = smul.addr %s284, 32
          %s286 = scalar_lea.vmem [#allocation7], %s285
          %s287 = smul.u32 8, %s30
          %s289 = ssub.s32 512, 512
          %290 = vsyncadd %s283, %s289
          %s291 = smul.addr %s287, 64
          %s292 = scalar_lea.hbm %s3, %s291
          %s293 = sshll.u32 %s286, 4
          %s294 = int_to_ptr.vmem [resolvable:$true] %s293
          %299 = dma.hbm_to_vmem [thread:$0]  %s292, 512, %s294, %s283, 64, 64, 4
        $region32: #{tpu_custom_call.1} parent=15 // pred_fallthru
          _
        // Predicated region
        $region33: #{tpu_custom_call.1} parent=15 // pred_check
          %p300 = pneg %p170
        $region34: #{tpu_custom_call.1} parent=15 // pred_check_branch
          %302 = sbr.rel (%p300) target = $region36
        $region35: #{tpu_custom_call.1} parent=15 // pred_region
          %s303 = sand.u32 %s160, 1
          %s304 = scalar_lea.sflag [#allocation9], %s303
          %s305 = sand.u32 %s160, 1
          %s306 = smul.addr %s305, 128
          %s307 = scalar_lea.vmem [#allocation8], %s306
          %s308 = smul.u32 2, %s31
          %s310 = ssub.s32 2048, 2048
          %311 = vsyncadd %s304, %s310
          %s312 = smul.addr %s308, 64
          %s313 = scalar_lea.hbm %s4, %s312
          %s314 = sshll.u32 %s307, 4
          %s315 = int_to_ptr.vmem [resolvable:$true] %s314
          %320 = dma.hbm_to_vmem [thread:$0]  %s313, 2048, %s315, %s304, 256, 128, 8
        $region36: #{tpu_custom_call.1} parent=15 // pred_fallthru
          _
      $region16: #{tpu_custom_call.1} parent=5 // pred_fallthru
        _
      %p321 = scmp.le.s32.totalorder 1, %s23
      %p322 = scmp.lt.s32.totalorder %s23, 9
      %p323 = pnand %p321, %p322
      %p324 = pneg %p323
      // Predicated region
      $region37: #{tpu_custom_call.1} parent=5 // pred_check
        _
      $region38: #{tpu_custom_call.1} parent=5 // pred_check_branch
        %326 = sbr.rel (%p323) target = $region40
      $region39: #{tpu_custom_call.1} parent=5 // pred_region
        %s327 = ssub.s32 %s23, 1
        %s328 = sand.u32 %s57, 1
        %s329 = scalar_lea.sflag [#allocation3], %s328
        %s330 = sand.u32 %s57, 1
        %s331 = smul.addr %s330, 64
        %s332 = scalar_lea.vmem [#allocation2], %s331
        // Predicated region
        $region41: #{tpu_custom_call.1} parent=39 // pred_check
          %p333 = pneg %p70
        $region42: #{tpu_custom_call.1} parent=39 // pred_check_branch
          %335 = sbr.rel (%p333) target = $region44
        $region43: #{tpu_custom_call.1} parent=39 // pred_region
          %336 = dma.done %s329, 1024
        $region44: #{tpu_custom_call.1} parent=39 // pred_fallthru
          _
        %s337 = sand.u32 %s28, 1
        %s338 = scalar_lea.sflag [#allocation6], %s337
        %s339 = sand.u32 %s85, 1
        %s340 = smul.addr %s339, 256
        %s341 = scalar_lea.vmem [#allocation5], %s340
        // Predicated region
        $region45: #{tpu_custom_call.1} parent=39 // pred_check
          %p342 = pneg %p98
        $region46: #{tpu_custom_call.1} parent=39 // pred_check_branch
          %344 = sbr.rel (%p342) target = $region48
        $region47: #{tpu_custom_call.1} parent=39 // pred_region
          %345 = dma.done %s338, 4096
        $region48: #{tpu_custom_call.1} parent=39 // pred_fallthru
          _
        %s346 = sand.u32 %s28, 1
        %s347 = scalar_lea.sflag [#allocation6], %s346
        %s348 = sand.u32 %s137, 1
        %s349 = smul.addr %s348, 32
        %s350 = scalar_lea.vmem [#allocation7], %s349
        // Predicated region
        $region49: #{tpu_custom_call.1} parent=39 // pred_check
          %p351 = pneg %p150
        $region50: #{tpu_custom_call.1} parent=39 // pred_check_branch
          %353 = sbr.rel (%p351) target = $region52
        $region51: #{tpu_custom_call.1} parent=39 // pred_region
          %354 = dma.done %s347, 512
        $region52: #{tpu_custom_call.1} parent=39 // pred_fallthru
          _
        %s355 = sand.u32 %s163, 1
        %s356 = scalar_lea.sflag [#allocation9], %s355
        %s357 = sand.u32 %s163, 1
        %s358 = smul.addr %s357, 128
        %s359 = scalar_lea.vmem [#allocation8], %s358
        // Predicated region
        $region53: #{tpu_custom_call.1} parent=39 // pred_check
          %p360 = pneg %p176
        $region54: #{tpu_custom_call.1} parent=39 // pred_check_branch
          %362 = sbr.rel (%p360) target = $region56
        $region55: #{tpu_custom_call.1} parent=39 // pred_region
          %363 = dma.done %s356, 2048
        $region56: #{tpu_custom_call.1} parent=39 // pred_fallthru
          _
        %s364 = sand.u32 %s57, 1
        %s365 = scalar_lea.sflag [#allocation3], %s364
        %s366 = sand.u32 %s57, 1
        %s367 = smul.addr %s366, 64
        %s368 = scalar_lea.vmem [#allocation2], %s367
        %p369 = pneg %p70
        %p370 = pneg %p67
        %s371 = sand.u32 %s28, 1
        %s372 = scalar_lea.sflag [#allocation6], %s371
        %s373 = sand.u32 %s85, 1
        %s374 = smul.addr %s373, 256
        %s375 = scalar_lea.vmem [#allocation5], %s374
        %p376 = pneg %p98
        %p377 = pneg %p95
        %s378 = smul.u32 2, %s34
        %p379 = scmp.lt.s32.totalorder %s378, 3
        %s380 = scalar_select %p379, %s378, 3
        %s381 = scalar_lea.vmem %s2, %s380
        %p382 = pneg %p124
        %p383 = pneg %p121
        %s384 = sand.u32 %s28, 1
        %s385 = scalar_lea.sflag [#allocation6], %s384
        %s386 = sand.u32 %s137, 1
        %s387 = smul.addr %s386, 32
        %s388 = scalar_lea.vmem [#allocation7], %s387
        %p389 = pneg %p150
        %p390 = pneg %p147
        %s391 = sand.u32 %s163, 1
        %s392 = scalar_lea.sflag [#allocation9], %s391
        %s393 = sand.u32 %s163, 1
        %s394 = smul.addr %s393, 128
        %s395 = scalar_lea.vmem [#allocation8], %s394
        %p396 = pneg %p176
        %p397 = pneg %p173
        %p398 = pneg %p204
        %p399 = pneg %p201
        %s400 = sand.u32 %s191, 1
        %s401 = scalar_lea.sflag [#allocation4], %s400
        %s402 = sand.u32 %s191, 1
        %s403 = smul.addr %s402, 128
        %s404 = scalar_lea.vmem [#allocation10], %s403
        %s405 = smul.u32 8, %s33
        %s406 = smul.u32 2, %s35
        %s407 = smul.u32 32, %s35
        %s408 = smul.u32 2, %s34
        %s409 = smul.u32 2, %s34
        %p410 = scmp.lt.s32.totalorder %s409, 3
        %s411 = scalar_select %p410, %s409, 3
        %s412 = scalar_lea.vmem %s2, %s411
        %s413 = smul.u32 2, %s34
        %s414 = smul.u32 8, %s33
        %s415 = smul.u32 2, %s34
        %s416 = smul.u32 8, %s33
        %s417 = smul.u32 2, %s34
        %p419 = scmp.eq.s32.totalorder %s35, 0
        // Predicated region
        $region57: #{tpu_custom_call.1} parent=39 // pred_check
          %p420 = pneg %p419
        $region58: #{tpu_custom_call.1} parent=39 // pred_check_branch
          %422 = sbr.rel (%p420) target = $region60
        $region59: #{tpu_custom_call.1} parent=39 // pred_region
          %423 = vst [vmem:[%s404] sm:$0xff] 0.0
          %424 = vst [vmem:[%s404 + $0x8] sm:$0xff] 0.0
          %425 = vst [vmem:[%s404 + $0x10] sm:$0xff] 0.0
          %426 = vst [vmem:[%s404 + $0x18] sm:$0xff] 0.0
          %427 = vst [vmem:[%s404 + $0x20] sm:$0xff] 0.0
          %428 = vst [vmem:[%s404 + $0x28] sm:$0xff] 0.0
          %429 = vst [vmem:[%s404 + $0x30] sm:$0xff] 0.0
          %430 = vst [vmem:[%s404 + $0x38] sm:$0xff] 0.0
          %431 = vst [vmem:[%s404 + $0x40] sm:$0xff] 0.0
          %432 = vst [vmem:[%s404 + $0x48] sm:$0xff] 0.0
          %433 = vst [vmem:[%s404 + $0x50] sm:$0xff] 0.0
          %434 = vst [vmem:[%s404 + $0x58] sm:$0xff] 0.0
          %435 = vst [vmem:[%s404 + $0x60] sm:$0xff] 0.0
          %436 = vst [vmem:[%s404 + $0x68] sm:$0xff] 0.0
          %437 = vst [vmem:[%s404 + $0x70] sm:$0xff] 0.0
          %438 = vst [vmem:[%s404 + $0x78] sm:$0xff] 0.0
        $region60: #{tpu_custom_call.1} parent=39 // pred_fallthru
          _
        %v439 = vld [vmem:[%s404] sm:$0xff]
        %v440 = vld [vmem:[%s404 + $0x8] sm:$0xff]
        %v441 = vld [vmem:[%s404 + $0x10] sm:$0xff]
        %v442 = vld [vmem:[%s404 + $0x18] sm:$0xff]
        %v443 = vld [vmem:[%s404 + $0x20] sm:$0xff]
        %v444 = vld [vmem:[%s404 + $0x28] sm:$0xff]
        %v445 = vld [vmem:[%s404 + $0x30] sm:$0xff]
        %v446 = vld [vmem:[%s404 + $0x38] sm:$0xff]
        %v447 = vld [vmem:[%s404 + $0x40] sm:$0xff]
        %v448 = vld [vmem:[%s404 + $0x48] sm:$0xff]
        %v449 = vld [vmem:[%s404 + $0x50] sm:$0xff]
        %v450 = vld [vmem:[%s404 + $0x58] sm:$0xff]
        %v451 = vld [vmem:[%s404 + $0x60] sm:$0xff]
        %v452 = vld [vmem:[%s404 + $0x68] sm:$0xff]
        %v453 = vld [vmem:[%s404 + $0x70] sm:$0xff]
        %v454 = vld [vmem:[%s404 + $0x78] sm:$0xff]
        %v455 = vld [vmem:[%s332] sm:$0xff]
        %v456 = vld [vmem:[%s332 + $0x8] sm:$0xff]
        %v457 = vld [vmem:[%s332 + $0x10] sm:$0xff]
        %v458 = vld [vmem:[%s332 + $0x18] sm:$0xff]
        %v459 = vld [vmem:[%s332 + $0x20] sm:$0xff]
        %v460 = vld [vmem:[%s332 + $0x28] sm:$0xff]
        %v461 = vld [vmem:[%s332 + $0x30] sm:$0xff]
        %v462 = vld [vmem:[%s332 + $0x38] sm:$0xff]
        %v463 = vld [vmem:[%s341] sm:$0xff]
        %v464 = vld [vmem:[%s341 + $0x8] sm:$0xff]
        %v465 = vld [vmem:[%s341 + $0x10] sm:$0xff]
        %v466 = vld [vmem:[%s341 + $0x18] sm:$0xff]
        %v467 = vld [vmem:[%s341 + $0x20] sm:$0xff]
        %v468 = vld [vmem:[%s341 + $0x28] sm:$0xff]
        %v469 = vld [vmem:[%s341 + $0x30] sm:$0xff]
        %v470 = vld [vmem:[%s341 + $0x38] sm:$0xff]
        %v471 = vld [vmem:[%s341 + $0x40] sm:$0xff]
        %v472 = vld [vmem:[%s341 + $0x48] sm:$0xff]
        %v473 = vld [vmem:[%s341 + $0x50] sm:$0xff]
        %v474 = vld [vmem:[%s341 + $0x58] sm:$0xff]
        %v475 = vld [vmem:[%s341 + $0x60] sm:$0xff]
        %v476 = vld [vmem:[%s341 + $0x68] sm:$0xff]
        %v477 = vld [vmem:[%s341 + $0x70] sm:$0xff]
        %v478 = vld [vmem:[%s341 + $0x78] sm:$0xff]
        %v479 = vld [vmem:[%s341 + $0x80] sm:$0xff]
        %v480 = vld [vmem:[%s341 + $0x88] sm:$0xff]
        %v481 = vld [vmem:[%s341 + $0x90] sm:$0xff]
        %v482 = vld [vmem:[%s341 + $0x98] sm:$0xff]
        %v483 = vld [vmem:[%s341 + $0xa0] sm:$0xff]
        %v484 = vld [vmem:[%s341 + $0xa8] sm:$0xff]
        %v485 = vld [vmem:[%s341 + $0xb0] sm:$0xff]
        %v486 = vld [vmem:[%s341 + $0xb8] sm:$0xff]
        %v487 = vld [vmem:[%s341 + $0xc0] sm:$0xff]
        %v488 = vld [vmem:[%s341 + $0xc8] sm:$0xff]
        %v489 = vld [vmem:[%s341 + $0xd0] sm:$0xff]
        %v490 = vld [vmem:[%s341 + $0xd8] sm:$0xff]
        %v491 = vld [vmem:[%s341 + $0xe0] sm:$0xff]
        %v492 = vld [vmem:[%s341 + $0xe8] sm:$0xff]
        %v493 = vld [vmem:[%s341 + $0xf0] sm:$0xff]
        %v494 = vld [vmem:[%s341 + $0xf8] sm:$0xff]
        %v503 = vunpack.c.l.b16 %v455
        %v504 = vunpack.c.h.b16 %v455
        %v505 = vunpack.c.l.b16 %v456
        %v506 = vunpack.c.h.b16 %v456
        %v507 = vunpack.c.l.b16 %v457
        %v508 = vunpack.c.h.b16 %v457
        %v509 = vunpack.c.l.b16 %v458
        %v510 = vunpack.c.h.b16 %v458
        %v511 = vunpack.c.l.b16 %v459
        %v512 = vunpack.c.h.b16 %v459
        %v513 = vunpack.c.l.b16 %v460
        %v514 = vunpack.c.h.b16 %v460
        %v515 = vunpack.c.l.b16 %v461
        %v516 = vunpack.c.h.b16 %v461
        %v517 = vunpack.c.l.b16 %v462
        %v518 = vunpack.c.h.b16 %v462
        %v519 = vpack.c.b16 %v505, %v503
        %v520 = vpack.c.b16 %v506, %v504
        %v521 = vpack.c.b16 %v509, %v507
        %v522 = vpack.c.b16 %v510, %v508
        %v523 = vpack.c.b16 %v513, %v511
        %v524 = vpack.c.b16 %v514, %v512
        %v525 = vpack.c.b16 %v517, %v515
        %v526 = vpack.c.b16 %v518, %v516
        %v567 = vunpack.c.l.b16 %v463
        %v568 = vunpack.c.h.b16 %v463
        %v569 = vunpack.c.l.b16 %v464
        %v570 = vunpack.c.h.b16 %v464
        %v571 = vunpack.c.l.b16 %v465
        %v572 = vunpack.c.h.b16 %v465
        %v573 = vunpack.c.l.b16 %v466
        %v574 = vunpack.c.h.b16 %v466
        %v575 = vunpack.c.l.b16 %v467
        %v576 = vunpack.c.h.b16 %v467
        %v577 = vunpack.c.l.b16 %v468
        %v578 = vunpack.c.h.b16 %v468
        %v579 = vunpack.c.l.b16 %v469
        %v580 = vunpack.c.h.b16 %v469
        %v581 = vunpack.c.l.b16 %v470
        %v582 = vunpack.c.h.b16 %v470
        %v583 = vunpack.c.l.b16 %v471
        %v584 = vunpack.c.h.b16 %v471
        %v585 = vunpack.c.l.b16 %v472
        %v586 = vunpack.c.h.b16 %v472
        %v587 = vunpack.c.l.b16 %v473
        %v588 = vunpack.c.h.b16 %v473
        %v589 = vunpack.c.l.b16 %v474
        %v590 = vunpack.c.h.b16 %v474
        %v591 = vunpack.c.l.b16 %v475
        %v592 = vunpack.c.h.b16 %v475
        %v593 = vunpack.c.l.b16 %v476
        %v594 = vunpack.c.h.b16 %v476
        %v595 = vunpack.c.l.b16 %v477
        %v596 = vunpack.c.h.b16 %v477
        %v597 = vunpack.c.l.b16 %v478
        %v598 = vunpack.c.h.b16 %v478
        %v599 = vunpack.c.l.b16 %v479
        %v600 = vunpack.c.h.b16 %v479
        %v601 = vunpack.c.l.b16 %v480
        %v602 = vunpack.c.h.b16 %v480
        %v603 = vunpack.c.l.b16 %v481
        %v604 = vunpack.c.h.b16 %v481
        %v605 = vunpack.c.l.b16 %v482
        %v606 = vunpack.c.h.b16 %v482
        %v607 = vunpack.c.l.b16 %v483
        %v608 = vunpack.c.h.b16 %v483
        %v609 = vunpack.c.l.b16 %v484
        %v610 = vunpack.c.h.b16 %v484
        %v611 = vunpack.c.l.b16 %v485
        %v612 = vunpack.c.h.b16 %v485
        %v613 = vunpack.c.l.b16 %v486
        %v614 = vunpack.c.h.b16 %v486
        %v615 = vunpack.c.l.b16 %v487
        %v616 = vunpack.c.h.b16 %v487
        %v617 = vunpack.c.l.b16 %v488
        %v618 = vunpack.c.h.b16 %v488
        %v619 = vunpack.c.l.b16 %v489
        %v620 = vunpack.c.h.b16 %v489
        %v621 = vunpack.c.l.b16 %v490
        %v622 = vunpack.c.h.b16 %v490
        %v623 = vunpack.c.l.b16 %v491
        %v624 = vunpack.c.h.b16 %v491
        %v625 = vunpack.c.l.b16 %v492
        %v626 = vunpack.c.h.b16 %v492
        %v627 = vunpack.c.l.b16 %v493
        %v628 = vunpack.c.h.b16 %v493
        %v629 = vunpack.c.l.b16 %v494
        %v630 = vunpack.c.h.b16 %v494
        %v631 = vpack.c.b16 %v569, %v567
        %v632 = vpack.c.b16 %v570, %v568
        %v633 = vpack.c.b16 %v573, %v571
        %v634 = vpack.c.b16 %v574, %v572
        %v635 = vpack.c.b16 %v577, %v575
        %v636 = vpack.c.b16 %v578, %v576
        %v637 = vpack.c.b16 %v581, %v579
        %v638 = vpack.c.b16 %v582, %v580
        %v639 = vpack.c.b16 %v585, %v583
        %v640 = vpack.c.b16 %v586, %v584
        %v641 = vpack.c.b16 %v589, %v587
        %v642 = vpack.c.b16 %v590, %v588
        %v643 = vpack.c.b16 %v593, %v591
        %v644 = vpack.c.b16 %v594, %v592
        %v645 = vpack.c.b16 %v597, %v595
        %v646 = vpack.c.b16 %v598, %v596
        %v647 = vpack.c.b16 %v601, %v599
        %v648 = vpack.c.b16 %v602, %v600
        %v649 = vpack.c.b16 %v605, %v603
        %v650 = vpack.c.b16 %v606, %v604
        %v651 = vpack.c.b16 %v609, %v607
        %v652 = vpack.c.b16 %v610, %v608
        %v653 = vpack.c.b16 %v613, %v611
        %v654 = vpack.c.b16 %v614, %v612
        %v655 = vpack.c.b16 %v617, %v615
        %v656 = vpack.c.b16 %v618, %v616
        %v657 = vpack.c.b16 %v621, %v619
        %v658 = vpack.c.b16 %v622, %v620
        %v659 = vpack.c.b16 %v625, %v623
        %v660 = vpack.c.b16 %v626, %v624
        %v661 = vpack.c.b16 %v629, %v627
        %v662 = vpack.c.b16 %v630, %v628
        %695 = vmatprep.subr.bf16.mxu0 %v632
        %696 = vmatpush1.bf16.msra.mxu0 %v631
        %697 = vmatprep.subr.bf16.mxu0 %v634
        %698 = vmatpush1.bf16.msra.mxu0 %v633
        %699 = vmatprep.subr.bf16.mxu0 %v636
        %700 = vmatpush1.bf16.msra.mxu0 %v635
        %701 = vmatprep.subr.bf16.mxu0 %v638
        %702 = vmatpush1.bf16.msra.mxu0 %v637
        %703 = vmatprep.subr.bf16.mxu0 %v640
        %704 = vmatpush1.bf16.msra.mxu0 %v639
        %705 = vmatprep.subr.bf16.mxu0 %v642
        %706 = vmatpush1.bf16.msra.mxu0 %v641
        %707 = vmatprep.subr.bf16.mxu0 %v644
        %708 = vmatpush1.bf16.msra.mxu0 %v643
        %709 = vmatprep.subr.bf16.mxu0 %v646
        %710 = vmatpush1.bf16.msra.mxu0 %v645
        %711 = vmatprep.subr.bf16.mxu0 %v648
        %712 = vmatpush1.bf16.msra.mxu0 %v647
        %713 = vmatprep.subr.bf16.mxu0 %v650
        %714 = vmatpush1.bf16.msra.mxu0 %v649
        %715 = vmatprep.subr.bf16.mxu0 %v652
        %716 = vmatpush1.bf16.msra.mxu0 %v651
        %717 = vmatprep.subr.bf16.mxu0 %v654
        %718 = vmatpush1.bf16.msra.mxu0 %v653
        %719 = vmatprep.subr.bf16.mxu0 %v656
        %720 = vmatpush1.bf16.msra.mxu0 %v655
        %721 = vmatprep.subr.bf16.mxu0 %v658
        %722 = vmatpush1.bf16.msra.mxu0 %v657
        %723 = vmatprep.subr.bf16.mxu0 %v660
        %724 = vmatpush1.bf16.msra.mxu0 %v659
        %725 = vmatprep.subr.bf16.mxu0 %v662
        %726 = vmatpush1.bf16.msra.mxu0 %v661
        %727 = vmatprep.mubr.bf16.mxu0 %v520
        %728 = vmatmul.mubr.bf16.gmra.mrb[0].mxu0 %v519
        %v729 = vpop.f32.mrb[0].mxu0
        %v730 = vadd.f32 0.0, %v729
        %v731 = vpop.f32.mrb[0].mxu0
        %v732 = vadd.f32 0.0, %v731
        %v733 = vpop.f32.mrb[0].mxu0
        %v734 = vadd.f32 0.0, %v733
        %v735 = vpop.f32.mrb[0].mxu0
        %v736 = vadd.f32 0.0, %v735
        %737 = vmatprep.mubr.bf16.mxu0 %v522
        %738 = vmatmul.mubr.bf16.gmra.mrb[0].mxu0 %v521
        %v739 = vpop.f32.mrb[0].mxu0
        %v740 = vadd.f32 0.0, %v739
        %v741 = vpop.f32.mrb[0].mxu0
        %v742 = vadd.f32 0.0, %v741
        %v743 = vpop.f32.mrb[0].mxu0
        %v744 = vadd.f32 0.0, %v743
        %v745 = vpop.f32.mrb[0].mxu0
        %v746 = vadd.f32 0.0, %v745
        %747 = vmatprep.mubr.bf16.mxu0 %v524
        %748 = vmatmul.mubr.bf16.gmra.mrb[0].mxu0 %v523
        %v749 = vpop.f32.mrb[0].mxu0
        %v750 = vadd.f32 0.0, %v749
        %v751 = vpop.f32.mrb[0].mxu0
        %v752 = vadd.f32 0.0, %v751
        %v753 = vpop.f32.mrb[0].mxu0
        %v754 = vadd.f32 0.0, %v753
        %v755 = vpop.f32.mrb[0].mxu0
        %v756 = vadd.f32 0.0, %v755
        %757 = vmatprep.mubr.bf16.mxu0 %v526
        %758 = vmatmul.mubr.bf16.gmra.mrb[0].mxu0 %v525
        %v759 = vpop.f32.mrb[0].mxu0
        %v760 = vadd.f32 0.0, %v759
        %v761 = vpop.f32.mrb[0].mxu0
        %v762 = vadd.f32 0.0, %v761
        %v763 = vpop.f32.mrb[0].mxu0
        %v764 = vadd.f32 0.0, %v763
        %v765 = vpop.f32.mrb[0].mxu0
        %v766 = vadd.f32 0.0, %v765
        %767 = vdwg.mxu0
        %v768 = vadd.f32 %v439, %v730
        %v769 = vadd.f32 %v440, %v732
        %v770 = vadd.f32 %v441, %v734
        %v771 = vadd.f32 %v442, %v736
        %v772 = vadd.f32 %v443, %v740
        %v773 = vadd.f32 %v444, %v742
        %v774 = vadd.f32 %v445, %v744
        %v775 = vadd.f32 %v446, %v746
        %v776 = vadd.f32 %v447, %v750
        %v777 = vadd.f32 %v448, %v752
        %v778 = vadd.f32 %v449, %v754
        %v779 = vadd.f32 %v450, %v756
        %v780 = vadd.f32 %v451, %v760
        %v781 = vadd.f32 %v452, %v762
        %v782 = vadd.f32 %v453, %v764
        %v783 = vadd.f32 %v454, %v766
        %784 = vst [vmem:[%s404] sm:$0xff] %v768
        %785 = vst [vmem:[%s404 + $0x8] sm:$0xff] %v769
        %786 = vst [vmem:[%s404 + $0x10] sm:$0xff] %v770
        %787 = vst [vmem:[%s404 + $0x18] sm:$0xff] %v771
        %788 = vst [vmem:[%s404 + $0x20] sm:$0xff] %v772
        %789 = vst [vmem:[%s404 + $0x28] sm:$0xff] %v773
        %790 = vst [vmem:[%s404 + $0x30] sm:$0xff] %v774
        %791 = vst [vmem:[%s404 + $0x38] sm:$0xff] %v775
        %792 = vst [vmem:[%s404 + $0x40] sm:$0xff] %v776
        %793 = vst [vmem:[%s404 + $0x48] sm:$0xff] %v777
        %794 = vst [vmem:[%s404 + $0x50] sm:$0xff] %v778
        %795 = vst [vmem:[%s404 + $0x58] sm:$0xff] %v779
        %796 = vst [vmem:[%s404 + $0x60] sm:$0xff] %v780
        %797 = vst [vmem:[%s404 + $0x68] sm:$0xff] %v781
        %798 = vst [vmem:[%s404 + $0x70] sm:$0xff] %v782
        %799 = vst [vmem:[%s404 + $0x78] sm:$0xff] %v783
        %p800 = scmp.eq.s32.totalorder %s35, 1
        // Predicated region
        $region61: #{tpu_custom_call.1} parent=39 // pred_check
          %p801 = pneg %p800
        $region62: #{tpu_custom_call.1} parent=39 // pred_check_branch
          %803 = sbr.rel (%p801) target = $region64
        $region63: #{tpu_custom_call.1} parent=39 // pred_region
          %v804 = vld [vmem:[%s350] sm:$0xf]
          %v805 = vld [vmem:[%s350 + $0x4] sm:$0xf]
          %v806 = vld [vmem:[%s350 + $0x8] sm:$0xf]
          %v807 = vld [vmem:[%s350 + $0xc] sm:$0xf]
          %v808 = vld [vmem:[%s350 + $0x10] sm:$0xf]
          %v809 = vld [vmem:[%s350 + $0x14] sm:$0xf]
          %v810 = vld [vmem:[%s350 + $0x18] sm:$0xf]
          %v811 = vld [vmem:[%s350 + $0x1c] sm:$0xf]
          %v812 = vld [vmem:[%s359] sm:$0xff]
          %v813 = vld [vmem:[%s359 + $0x8] sm:$0xff]
          %v814 = vld [vmem:[%s359 + $0x10] sm:$0xff]
          %v815 = vld [vmem:[%s359 + $0x18] sm:$0xff]
          %v816 = vld [vmem:[%s359 + $0x20] sm:$0xff]
          %v817 = vld [vmem:[%s359 + $0x28] sm:$0xff]
          %v818 = vld [vmem:[%s359 + $0x30] sm:$0xff]
          %v819 = vld [vmem:[%s359 + $0x38] sm:$0xff]
          %v820 = vld [vmem:[%s359 + $0x40] sm:$0xff]
          %v821 = vld [vmem:[%s359 + $0x48] sm:$0xff]
          %v822 = vld [vmem:[%s359 + $0x50] sm:$0xff]
          %v823 = vld [vmem:[%s359 + $0x58] sm:$0xff]
          %v824 = vld [vmem:[%s359 + $0x60] sm:$0xff]
          %v825 = vld [vmem:[%s359 + $0x68] sm:$0xff]
          %v826 = vld [vmem:[%s359 + $0x70] sm:$0xff]
          %v827 = vld [vmem:[%s359 + $0x78] sm:$0xff]
          %v836 = vunpack.c.l.b16 %v804
          %v837 = vunpack.c.l.b16 %v805
          %v838 = vunpack.c.l.b16 %v806
          %v839 = vunpack.c.l.b16 %v807
          %v840 = vunpack.c.l.b16 %v808
          %v841 = vunpack.c.l.b16 %v809
          %v842 = vunpack.c.l.b16 %v810
          %v843 = vunpack.c.l.b16 %v811
          %v844 = vpack.c.b16 %v837, %v836
          %v845 = vpack.c.b16 %v839, %v838
          %v846 = vpack.c.b16 %v841, %v840
          %v847 = vpack.c.b16 %v843, %v842
          %v868 = vunpack.c.l.b16 %v812
          %v869 = vunpack.c.h.b16 %v812
          %v870 = vunpack.c.l.b16 %v813
          %v871 = vunpack.c.h.b16 %v813
          %v872 = vunpack.c.l.b16 %v814
          %v873 = vunpack.c.h.b16 %v814
          %v874 = vunpack.c.l.b16 %v815
          %v875 = vunpack.c.h.b16 %v815
          %v876 = vunpack.c.l.b16 %v816
          %v877 = vunpack.c.h.b16 %v816
          %v878 = vunpack.c.l.b16 %v817
          %v879 = vunpack.c.h.b16 %v817
          %v880 = vunpack.c.l.b16 %v818
          %v881 = vunpack.c.h.b16 %v818
          %v882 = vunpack.c.l.b16 %v819
          %v883 = vunpack.c.h.b16 %v819
          %v884 = vunpack.c.l.b16 %v820
          %v885 = vunpack.c.h.b16 %v820
          %v886 = vunpack.c.l.b16 %v821
          %v887 = vunpack.c.h.b16 %v821
          %v888 = vunpack.c.l.b16 %v822
          %v889 = vunpack.c.h.b16 %v822
          %v890 = vunpack.c.l.b16 %v823
          %v891 = vunpack.c.h.b16 %v823
          %v892 = vunpack.c.l.b16 %v824
          %v893 = vunpack.c.h.b16 %v824
          %v894 = vunpack.c.l.b16 %v825
          %v895 = vunpack.c.h.b16 %v825
          %v896 = vunpack.c.l.b16 %v826
          %v897 = vunpack.c.h.b16 %v826
          %v898 = vunpack.c.l.b16 %v827
          %v899 = vunpack.c.h.b16 %v827
          %v900 = vpack.c.b16 %v870, %v868
          %v901 = vpack.c.b16 %v871, %v869
          %v902 = vpack.c.b16 %v874, %v872
          %v903 = vpack.c.b16 %v875, %v873
          %v904 = vpack.c.b16 %v878, %v876
          %v905 = vpack.c.b16 %v879, %v877
          %v906 = vpack.c.b16 %v882, %v880
          %v907 = vpack.c.b16 %v883, %v881
          %v908 = vpack.c.b16 %v886, %v884
          %v909 = vpack.c.b16 %v887, %v885
          %v910 = vpack.c.b16 %v890, %v888
          %v911 = vpack.c.b16 %v891, %v889
          %v912 = vpack.c.b16 %v894, %v892
          %v913 = vpack.c.b16 %v895, %v893
          %v914 = vpack.c.b16 %v898, %v896
          %v915 = vpack.c.b16 %v899, %v897
          %932 = vmatprep.subr.bf16.mxu0 %v901
          %933 = vmatpush1.bf16.msra.mxu0 %v900
          %934 = vmatprep.subr.bf16.mxu0 %v903
          %935 = vmatpush1.bf16.msra.mxu0 %v902
          %936 = vmatprep.subr.bf16.mxu0 %v905
          %937 = vmatpush1.bf16.msra.mxu0 %v904
          %938 = vmatprep.subr.bf16.mxu0 %v907
          %939 = vmatpush1.bf16.msra.mxu0 %v906
          %940 = vmatprep.subr.bf16.mxu0 %v909
          %941 = vmatpush1.bf16.msra.mxu0 %v908
          %942 = vmatprep.subr.bf16.mxu0 %v911
          %943 = vmatpush1.bf16.msra.mxu0 %v910
          %944 = vmatprep.subr.bf16.mxu0 %v913
          %945 = vmatpush1.bf16.msra.mxu0 %v912
          %946 = vmatprep.subr.bf16.mxu0 %v915
          %947 = vmatpush1.bf16.msra.mxu0 %v914
          %948 = vmatprep.subr.bf16.mxu0 0
          %949 = vmatpush1.bf16.msra.mxu0 0
          %950 = vmatprep.subr.bf16.mxu0 0
          %951 = vmatpush1.bf16.msra.mxu0 0
          %952 = vmatprep.subr.bf16.mxu0 0
          %953 = vmatpush1.bf16.msra.mxu0 0
          %954 = vmatprep.subr.bf16.mxu0 0
          %955 = vmatpush1.bf16.msra.mxu0 0
          %956 = vmatprep.subr.bf16.mxu0 0
          %957 = vmatpush1.bf16.msra.mxu0 0
          %958 = vmatprep.subr.bf16.mxu0 0
          %959 = vmatpush1.bf16.msra.mxu0 0
          %960 = vmatprep.subr.bf16.mxu0 0
          %961 = vmatpush1.bf16.msra.mxu0 0
          %962 = vmatprep.subr.bf16.mxu0 0
          %963 = vmatpush1.bf16.msra.mxu0 0
          %964 = vmatprep.mubr.bf16.mxu0 0
          %965 = vmatmul.mubr.bf16.gmra.mrb[0].mxu0 %v844
          %v966 = vpop.f32.mrb[0].mxu0
          %v967 = vadd.f32 0.0, %v966
          %v968 = vpop.f32.mrb[0].mxu0
          %v969 = vadd.f32 0.0, %v968
          %v970 = vpop.f32.mrb[0].mxu0
          %v971 = vadd.f32 0.0, %v970
          %v972 = vpop.f32.mrb[0].mxu0
          %v973 = vadd.f32 0.0, %v972
          %974 = vmatprep.mubr.bf16.mxu0 0
          %975 = vmatmul.mubr.bf16.gmra.mrb[0].mxu0 %v845
          %v976 = vpop.f32.mrb[0].mxu0
          %v977 = vadd.f32 0.0, %v976
          %v978 = vpop.f32.mrb[0].mxu0
          %v979 = vadd.f32 0.0, %v978
          %v980 = vpop.f32.mrb[0].mxu0
          %v981 = vadd.f32 0.0, %v980
          %v982 = vpop.f32.mrb[0].mxu0
          %v983 = vadd.f32 0.0, %v982
          %984 = vmatprep.mubr.bf16.mxu0 0
          %985 = vmatmul.mubr.bf16.gmra.mrb[0].mxu0 %v846
          %v986 = vpop.f32.mrb[0].mxu0
          %v987 = vadd.f32 0.0, %v986
          %v988 = vpop.f32.mrb[0].mxu0
          %v989 = vadd.f32 0.0, %v988
          %v990 = vpop.f32.mrb[0].mxu0
          %v991 = vadd.f32 0.0, %v990
          %v992 = vpop.f32.mrb[0].mxu0
          %v993 = vadd.f32 0.0, %v992
          %994 = vmatprep.mubr.bf16.mxu0 0
          %995 = vmatmul.mubr.bf16.gmra.mrb[0].mxu0 %v847
          %v996 = vpop.f32.mrb[0].mxu0
          %v997 = vadd.f32 0.0, %v996
          %v998 = vpop.f32.mrb[0].mxu0
          %v999 = vadd.f32 0.0, %v998
          %v1000 = vpop.f32.mrb[0].mxu0
          %v1001 = vadd.f32 0.0, %v1000
          %v1002 = vpop.f32.mrb[0].mxu0
          %v1003 = vadd.f32 0.0, %v1002
          %1004 = vdwg.mxu0
          %v1005 = vld [vmem:[%s404] sm:$0xff]
          %v1006 = vld [vmem:[%s404 + $0x8] sm:$0xff]
          %v1007 = vld [vmem:[%s404 + $0x10] sm:$0xff]
          %v1008 = vld [vmem:[%s404 + $0x18] sm:$0xff]
          %v1009 = vld [vmem:[%s404 + $0x20] sm:$0xff]
          %v1010 = vld [vmem:[%s404 + $0x28] sm:$0xff]
          %v1011 = vld [vmem:[%s404 + $0x30] sm:$0xff]
          %v1012 = vld [vmem:[%s404 + $0x38] sm:$0xff]
          %v1013 = vld [vmem:[%s404 + $0x40] sm:$0xff]
          %v1014 = vld [vmem:[%s404 + $0x48] sm:$0xff]
          %v1015 = vld [vmem:[%s404 + $0x50] sm:$0xff]
          %v1016 = vld [vmem:[%s404 + $0x58] sm:$0xff]
          %v1017 = vld [vmem:[%s404 + $0x60] sm:$0xff]
          %v1018 = vld [vmem:[%s404 + $0x68] sm:$0xff]
          %v1019 = vld [vmem:[%s404 + $0x70] sm:$0xff]
          %v1020 = vld [vmem:[%s404 + $0x78] sm:$0xff]
          %v1021 = vld [vmem:[%s412] sm:$0x3]
          %v1023 = vlaneseq
          %v1024 = vshrl.u32 %v1023, 7
          %v1025 = vsub.s32 0, %v1024
          %v1026 = vrot.slane %v1021, %v1025
          %v1027 = vlaneseq
          %v1028 = vshrl.u32 %v1027, 7
          %v1029 = vsub.s32 1, %v1028
          %v1030 = vrot.slane %v1021, %v1029
          %v1033 = vadd.f32 %v1026, %v967
          %v1034 = vadd.f32 %v1030, %v969
          %v1035 = vadd.f32 %v1026, %v971
          %v1036 = vadd.f32 %v1030, %v973
          %v1037 = vadd.f32 %v1026, %v977
          %v1038 = vadd.f32 %v1030, %v979
          %v1039 = vadd.f32 %v1026, %v981
          %v1040 = vadd.f32 %v1030, %v983
          %v1041 = vadd.f32 %v1026, %v987
          %v1042 = vadd.f32 %v1030, %v989
          %v1043 = vadd.f32 %v1026, %v991
          %v1044 = vadd.f32 %v1030, %v993
          %v1045 = vadd.f32 %v1026, %v997
          %v1046 = vadd.f32 %v1030, %v999
          %v1047 = vadd.f32 %v1026, %v1001
          %v1048 = vadd.f32 %v1030, %v1003
          %v1049 = vadd.f32 %v1005, %v1033
          %v1050 = vadd.f32 %v1006, %v1034
          %v1051 = vadd.f32 %v1007, %v1035
          %v1052 = vadd.f32 %v1008, %v1036
          %v1053 = vadd.f32 %v1009, %v1037
          %v1054 = vadd.f32 %v1010, %v1038
          %v1055 = vadd.f32 %v1011, %v1039
          %v1056 = vadd.f32 %v1012, %v1040
          %v1057 = vadd.f32 %v1013, %v1041
          %v1058 = vadd.f32 %v1014, %v1042
          %v1059 = vadd.f32 %v1015, %v1043
          %v1060 = vadd.f32 %v1016, %v1044
          %v1061 = vadd.f32 %v1017, %v1045
          %v1062 = vadd.f32 %v1018, %v1046
          %v1063 = vadd.f32 %v1019, %v1047
          %v1064 = vadd.f32 %v1020, %v1048
          %1065 = vst [vmem:[%s404] sm:$0xff] %v1049
          %1066 = vst [vmem:[%s404 + $0x8] sm:$0xff] %v1050
          %1067 = vst [vmem:[%s404 + $0x10] sm:$0xff] %v1051
          %1068 = vst [vmem:[%s404 + $0x18] sm:$0xff] %v1052
          %1069 = vst [vmem:[%s404 + $0x20] sm:$0xff] %v1053
          %1070 = vst [vmem:[%s404 + $0x28] sm:$0xff] %v1054
          %1071 = vst [vmem:[%s404 + $0x30] sm:$0xff] %v1055
          %1072 = vst [vmem:[%s404 + $0x38] sm:$0xff] %v1056
          %1073 = vst [vmem:[%s404 + $0x40] sm:$0xff] %v1057
          %1074 = vst [vmem:[%s404 + $0x48] sm:$0xff] %v1058
          %1075 = vst [vmem:[%s404 + $0x50] sm:$0xff] %v1059
          %1076 = vst [vmem:[%s404 + $0x58] sm:$0xff] %v1060
          %1077 = vst [vmem:[%s404 + $0x60] sm:$0xff] %v1061
          %1078 = vst [vmem:[%s404 + $0x68] sm:$0xff] %v1062
          %1079 = vst [vmem:[%s404 + $0x70] sm:$0xff] %v1063
          %1080 = vst [vmem:[%s404 + $0x78] sm:$0xff] %v1064
        $region64: #{tpu_custom_call.1} parent=39 // pred_fallthru
          _
        %s1081 = sand.u32 %s191, 1
        %s1082 = scalar_lea.sflag [#allocation4], %s1081
        %s1083 = sand.u32 %s191, 1
        %s1084 = smul.addr %s1083, 128
        %s1085 = scalar_lea.vmem [#allocation10], %s1084
        // Predicated region
        $region65: #{tpu_custom_call.1} parent=39 // pred_check
          %p1086 = pneg %p201
        $region66: #{tpu_custom_call.1} parent=39 // pred_check_branch
          %1088 = sbr.rel (%p1086) target = $region68
        $region67: #{tpu_custom_call.1} parent=39 // pred_region
          %s1089 = smul.u32 8, %s33
          %s1090 = smul.u32 2, %s34
          %s1092 = ssub.s32 2048, 2048
          %1093 = vsyncadd %s1082, %s1092
          %s1094 = smul.addr %s1089, 4
          %s1095 = sadd.s32 %s1090, %s1094
          %s1096 = smul.addr %s1095, 128
          %s1097 = scalar_lea.hbm %s5, %s1096
          %s1098 = sshll.u32 %s1085, 4
          %s1099 = int_to_ptr.vmem [resolvable:$true] %s1098
          %1104 = dma.vmem_to_hbm [thread:$0]  %s1099, 2048, %s1097, %s1082, 256, 512, 16
        $region68: #{tpu_custom_call.1} parent=39 // pred_fallthru
          _
      $region40: #{tpu_custom_call.1} parent=5 // pred_fallthru
        _
      %p1105 = scmp.le.s32.totalorder 2, %s23
      // Predicated region
      $region69: #{tpu_custom_call.1} parent=5 // pred_check
        %p1106 = pneg %p1105
      $region70: #{tpu_custom_call.1} parent=5 // pred_check_branch
        %1108 = sbr.rel (%p1106) target = $region72
      $region71: #{tpu_custom_call.1} parent=5 // pred_region
        %s1109 = ssub.s32 %s23, 2
        // Predicated region
        $region73: #{tpu_custom_call.1} parent=71 // pred_check
          %p1110 = pneg %p207
        $region74: #{tpu_custom_call.1} parent=71 // pred_check_branch
          %1112 = sbr.rel (%p1110) target = $region76
        $region75: #{tpu_custom_call.1} parent=71 // pred_region
          %s1113 = sand.u32 %s192, 1
          %s1114 = scalar_lea.sflag [#allocation4], %s1113
          %s1115 = sand.u32 %s192, 1
          %s1116 = smul.addr %s1115, 128
          %s1117 = scalar_lea.vmem [#allocation10], %s1116
          %1118 = dma.done %s1114, 2048
        $region76: #{tpu_custom_call.1} parent=71 // pred_fallthru
          _
      $region72: #{tpu_custom_call.1} parent=5 // pred_fallthru
        _
    $region6: #{tpu_custom_call.1} parent=1 // loop_footer
      %s27 = sadd.s32 1, %s23
    $region7: #{tpu_custom_call.1} parent=1 // loop_footer_branch
      %22 = sbr.rel target = $region3
    $region8: #{tpu_custom_call.1} parent=1 // loop_exit
      _
    %1119 = vsyncpa [#allocation3], 1
    %s1120 = scalar_lea.sflag [#allocation3], 1
    %1121 = vsyncpa %s1120, 1
    %1122 = vsyncpa [#allocation6], 1
    %s1123 = scalar_lea.sflag [#allocation6], 1
    %1124 = vsyncpa %s1123, 1
    %1125 = vsyncpa [#allocation9], 1
    %s1126 = scalar_lea.sflag [#allocation9], 1
    %1127 = vsyncpa %s1126, 1
    %1128 = vsyncpa [#allocation4], 1
    %s1129 = scalar_lea.sflag [#allocation4], 1
    %1130 = vsyncpa %s1129, 1

</llo_original>
